<compile_context>
chip_gen: v6e
topology: v6e:2x2x1
jax: 0.10.0
libtpu: 0.0.40
codegen_flags: <defaults>
</compile_context>

<pallas_src>
import functools

import jax
import jax.numpy as jnp
from jax import lax
from jax.experimental import pallas as pl
from jax.experimental.pallas import tpu as pltpu

LANE = 128
SUB = 8


def _round_up(x, m):
    return (x + m - 1) // m * m


def _cdiv(a, b):
    return (a + b - 1) // b


def _dice_sums_kernel(yp_ref, yt_ref, inter_ref, denom_ref, acc_i, acc_s,
                      *, ts, s_total, mask_cols, n_groups):
    """Accumulate per-row lane-group partial sums of p*t and p+t."""
    s = pl.program_id(1)
    tr = acc_i.shape[0]

    @pl.when(s == 0)
    def _():
        acc_i[...] = jnp.zeros_like(acc_i)
        acc_s[...] = jnp.zeros_like(acc_s)

    def accumulate(off):
        # (TR, 128) slice of the (TR, TS) VMEM input block; cast in-kernel so
        # HBM traffic stays in the input dtype.
        xp = yp_ref[:, pl.ds(off, LANE)].astype(jnp.float32)
        xt = yt_ref[:, pl.ds(off, LANE)].astype(jnp.float32)
        if mask_cols:
            # Ragged spatial tail: zero out columns past the real extent so
            # the clipped (undefined) part of the boundary block is ignored.
            col = (s * ts + off
                   + lax.broadcasted_iota(jnp.int32, (tr, LANE), 1))
            valid = col < s_total
            xp = jnp.where(valid, xp, 0.0)
            xt = jnp.where(valid, xt, 0.0)
        acc_i[...] += xp * xt          # running intersection partials
        acc_s[...] += xp + xt          # running pred + true partials

    if n_groups <= 32:
        # Small group count: fully static unroll, static slice offsets.
        for g in range(n_groups):
            accumulate(g * LANE)
    else:
        def body(g, carry):
            accumulate(pl.multiple_of(g * LANE, LANE))
            return carry
        lax.fori_loop(0, n_groups, body, 0, unroll=8)

    @pl.when(s == pl.num_programs(1) - 1)
    def _():
        # Lane-dense, unmasked (TR, 128) stores of the lane-group partials.
        # No in-kernel cross-lane reduce; the wrapper does partials.sum(-1).
        inter_ref[...] = acc_i[...]
        denom_ref[...] = acc_s[...]


def simple_dice_loss(y_pred, y_true, smooth=1e-6):
    """Scalar Dice loss; y_pred / y_true are (B, C, H, W)."""
    assert y_pred.shape == y_true.shape
    B, C, H, W = y_pred.shape
    R, S = B * C, H * W

    yp = y_pred.reshape(R, S)
    yt = y_true.reshape(R, S)

    # Only pad when a dimension is smaller than a single (8, 128) tile
    # (negligible data); otherwise no padded HBM copies are made at all.
    r_work = max(R, SUB)
    s_work = max(S, LANE)
    if (r_work, s_work) != (R, S):
        pad = ((0, r_work - R), (0, s_work - S))
        yp = jnp.pad(yp, pad)          # zeros do not perturb any sum
        yt = jnp.pad(yt, pad)

    itemsize = yp.dtype.itemsize
    TARGET_TILE_BYTES = 4 << 20        # ~4 MiB per input block
    TR_CAP = 512                       # rows per tile cap
    MAX_GROUPS = 512                   # caps TS (lane groups per block)

    # --- row tiling: pick tile COUNT first so overhang stays < one tile ----
    r8 = _round_up(r_work, SUB)
    nr = _cdiv(r8, TR_CAP)
    if r8 >= 2 * SUB:
        nr = max(nr, 2)                # >=2 parallel row tiles -> both v7x TCs
    tr = _round_up(_cdiv(r8, nr), SUB)
    nr = _cdiv(r8, tr)
    r_out = nr * tr                    # output rows (overhang sliced off)

    # --- spatial tiling: ~TARGET bytes per block, multiple of 128 ----------
    s_units = _cdiv(s_work, LANE)
    target_groups = max(1, TARGET_TILE_BYTES // (tr * LANE * itemsize))
    groups = min(s_units, target_groups, MAX_GROUPS)
    ns = _cdiv(s_units, groups)
    groups = _cdiv(s_units, ns)        # rebalance so the last tile isn't tiny
    ts = groups * LANE

    mask_cols = (s_work % ts) != 0

    kernel = functools.partial(
        _dice_sums_kernel,
        ts=ts, s_total=s_work, mask_cols=mask_cols, n_groups=groups)

    in_spec = pl.BlockSpec((tr, ts), lambda r, s: (r, s))
    out_spec = pl.BlockSpec((tr, LANE), lambda r, s: (r, 0))

    inter_p, denom_p = pl.pallas_call(
        kernel,
        out_shape=(
            jax.ShapeDtypeStruct((r_out, LANE), jnp.float32),
            jax.ShapeDtypeStruct((r_out, LANE), jnp.float32),
        ),
        grid_spec=pltpu.PrefetchScalarGridSpec(
            num_scalar_prefetch=0,
            grid=(nr, ns),
            in_specs=[in_spec, in_spec],
            out_specs=[out_spec, out_spec],
            scratch_shapes=[
                pltpu.VMEM((tr, LANE), jnp.float32),
                pltpu.VMEM((tr, LANE), jnp.float32),
            ],
        ),
        compiler_params=pltpu.CompilerParams(
            dimension_semantics=("parallel", "arbitrary"),
            vmem_limit_bytes=32 * 1024 * 1024,
        ),
    )(yp, yt)

    # Tiny finalize in plain JAX: fold lane groups, per-(b,c) dice, then mean.
    inter = jnp.sum(inter_p[:R], axis=1)
    denom = jnp.sum(denom_p[:R], axis=1)
    dice = (2.0 * inter + smooth) / (denom + smooth)
    return 1.0 - jnp.mean(dice)


def _reference(y_pred, y_true, smooth=1e-6):
    inter = jnp.sum(y_pred * y_true, axis=(2, 3))
    denom = jnp.sum(y_pred, axis=(2, 3)) + jnp.sum(y_true, axis=(2, 3))
    dice = (2.0 * inter + smooth) / (denom + smooth)
    return 1.0 - jnp.mean(dice)


if __name__ == "__main__":
    key = jax.random.PRNGKey(0)
    B, C, H, W = 2, 4, 16, 16

    k1, k2 = jax.random.split(key)
    logits = jax.random.normal(k1, (B, C, H, W), dtype=jnp.float32)
    y_pred = jax.nn.softmax(logits, axis=1)                        # probs, NCHW
    labels = jax.random.randint(k2, (B, H, W), 0, C)
    y_true = jax.nn.one_hot(labels, C, axis=1, dtype=jnp.float32)  # one-hot

    loss = simple_dice_loss(y_pred, y_true)
    loss = jax.block_until_ready(loss)

    ref = _reference(y_pred, y_true)
    assert jnp.allclose(loss, ref, rtol=1e-5, atol=1e-6), (loss, ref)
    print("KERNEL_OK")
</pallas_src>

<mosaic_0001>
module attributes {stable_mosaic.version = 11 : i64} {
  func.func @_dice_sums_kernel(%arg0: i32, %arg1: i32, %arg2: memref<8x256xf32, #tpu.memory_space<vmem>>, %arg3: memref<8x256xf32, #tpu.memory_space<vmem>>, %arg4: memref<8x128xf32, #tpu.memory_space<vmem>>, %arg5: memref<8x128xf32, #tpu.memory_space<vmem>>, %arg6: memref<8x128xf32, #tpu.memory_space<vmem>>, %arg7: memref<8x128xf32, #tpu.memory_space<vmem>>) attributes {dimension_semantics = [#tpu.dimension_semantics<parallel>, #tpu.dimension_semantics<arbitrary>], iteration_bounds = array<i64: 1, 1>, scalar_prefetch = 0 : i64, scratch_operands = 2 : i64, tpu.core_type = #tpu.core_type<tc>, window_params = [{transform_indices = @transform_0, window_bounds = array<i64: 8, 256>}, {transform_indices = @transform_1, window_bounds = array<i64: 8, 256>}, {transform_indices = @transform_2, window_bounds = array<i64: 8, 128>}, {transform_indices = @transform_3, window_bounds = array<i64: 8, 128>}]} {
    %c0_i32 = arith.constant 0 : i32
    %0 = arith.cmpi eq, %arg1, %c0_i32 : i32
    %1 = arith.extui %0 : i1 to i32
    %c0_i32_0 = arith.constant 0 : i32
    %2 = arith.cmpi ne, %1, %c0_i32_0 : i32
    scf.if %2 {
      %cst = arith.constant 0.000000e+00 : f32
      %26 = vector.broadcast %cst : f32 to vector<8x128xf32>
      %c0_25 = arith.constant 0 : index
      %c0_26 = arith.constant 0 : index
      %27 = vector.load %arg6[%c0_25, %c0_26] : memref<8x128xf32, #tpu.memory_space<vmem>>, vector<8x128xf32>
      tpu.vector_store %arg6[%c0_25, %c0_26], %26 {strides = array<i32>} : memref<8x128xf32, #tpu.memory_space<vmem>>, vector<8x128xf32>,
      %cst_27 = arith.constant 0.000000e+00 : f32
      %28 = vector.broadcast %cst_27 : f32 to vector<8x128xf32>
      %c0_28 = arith.constant 0 : index
      %c0_29 = arith.constant 0 : index
      %29 = vector.load %arg7[%c0_28, %c0_29] : memref<8x128xf32, #tpu.memory_space<vmem>>, vector<8x128xf32>
      tpu.vector_store %arg7[%c0_28, %c0_29], %28 {strides = array<i32>} : memref<8x128xf32, #tpu.memory_space<vmem>>, vector<8x128xf32>,
    } else {
    }
    %c0 = arith.constant 0 : index
    %c0_1 = arith.constant 0 : index
    %3 = vector.load %arg2[%c0, %c0_1] : memref<8x256xf32, #tpu.memory_space<vmem>>, vector<8x128xf32>
    %c0_2 = arith.constant 0 : index
    %c0_3 = arith.constant 0 : index
    %4 = vector.load %arg3[%c0_2, %c0_3] : memref<8x256xf32, #tpu.memory_space<vmem>>, vector<8x128xf32>
    %c0_4 = arith.constant 0 : index
    %c0_5 = arith.constant 0 : index
    %5 = vector.load %arg6[%c0_4, %c0_5] : memref<8x128xf32, #tpu.memory_space<vmem>>, vector<8x128xf32>
    %6 = arith.mulf %3, %4 : vector<8x128xf32>
    %7 = arith.addf %5, %6 : vector<8x128xf32>
    %c0_6 = arith.constant 0 : index
    %c0_7 = arith.constant 0 : index
    %8 = vector.load %arg6[%c0_6, %c0_7] : memref<8x128xf32, #tpu.memory_space<vmem>>, vector<8x128xf32>
    tpu.vector_store %arg6[%c0_6, %c0_7], %7 {strides = array<i32>} : memref<8x128xf32, #tpu.memory_space<vmem>>, vector<8x128xf32>,
    %c0_8 = arith.constant 0 : index
    %c0_9 = arith.constant 0 : index
    %9 = vector.load %arg7[%c0_8, %c0_9] : memref<8x128xf32, #tpu.memory_space<vmem>>, vector<8x128xf32>
    %10 = arith.addf %3, %4 : vector<8x128xf32>
    %11 = arith.addf %9, %10 : vector<8x128xf32>
    %c0_10 = arith.constant 0 : index
    %c0_11 = arith.constant 0 : index
    %12 = vector.load %arg7[%c0_10, %c0_11] : memref<8x128xf32, #tpu.memory_space<vmem>>, vector<8x128xf32>
    tpu.vector_store %arg7[%c0_10, %c0_11], %11 {strides = array<i32>} : memref<8x128xf32, #tpu.memory_space<vmem>>, vector<8x128xf32>,
    %c0_12 = arith.constant 0 : index
    %c128 = arith.constant 128 : index
    %13 = vector.load %arg2[%c0_12, %c128] : memref<8x256xf32, #tpu.memory_space<vmem>>, vector<8x128xf32>
    %c0_13 = arith.constant 0 : index
    %c128_14 = arith.constant 128 : index
    %14 = vector.load %arg3[%c0_13, %c128_14] : memref<8x256xf32, #tpu.memory_space<vmem>>, vector<8x128xf32>
    %c0_15 = arith.constant 0 : index
    %c0_16 = arith.constant 0 : index
    %15 = vector.load %arg6[%c0_15, %c0_16] : memref<8x128xf32, #tpu.memory_space<vmem>>, vector<8x128xf32>
    %16 = arith.mulf %13, %14 : vector<8x128xf32>
    %17 = arith.addf %15, %16 : vector<8x128xf32>
    %c0_17 = arith.constant 0 : index
    %c0_18 = arith.constant 0 : index
    %18 = vector.load %arg6[%c0_17, %c0_18] : memref<8x128xf32, #tpu.memory_space<vmem>>, vector<8x128xf32>
    tpu.vector_store %arg6[%c0_17, %c0_18], %17 {strides = array<i32>} : memref<8x128xf32, #tpu.memory_space<vmem>>, vector<8x128xf32>,
    %c0_19 = arith.constant 0 : index
    %c0_20 = arith.constant 0 : index
    %19 = vector.load %arg7[%c0_19, %c0_20] : memref<8x128xf32, #tpu.memory_space<vmem>>, vector<8x128xf32>
    %20 = arith.addf %13, %14 : vector<8x128xf32>
    %21 = arith.addf %19, %20 : vector<8x128xf32>
    %c0_21 = arith.constant 0 : index
    %c0_22 = arith.constant 0 : index
    %22 = vector.load %arg7[%c0_21, %c0_22] : memref<8x128xf32, #tpu.memory_space<vmem>>, vector<8x128xf32>
    tpu.vector_store %arg7[%c0_21, %c0_22], %21 {strides = array<i32>} : memref<8x128xf32, #tpu.memory_space<vmem>>, vector<8x128xf32>,
    %c0_i32_23 = arith.constant 0 : i32
    %23 = arith.cmpi eq, %arg1, %c0_i32_23 : i32
    %24 = arith.extui %23 : i1 to i32
    %c0_i32_24 = arith.constant 0 : i32
    %25 = arith.cmpi ne, %24, %c0_i32_24 : i32
    scf.if %25 {
      %c0_25 = arith.constant 0 : index
      %c0_26 = arith.constant 0 : index
      %26 = vector.load %arg6[%c0_25, %c0_26] : memref<8x128xf32, #tpu.memory_space<vmem>>, vector<8x128xf32>
      %c0_27 = arith.constant 0 : index
      %c0_28 = arith.constant 0 : index
      %27 = vector.load %arg4[%c0_27, %c0_28] : memref<8x128xf32, #tpu.memory_space<vmem>>, vector<8x128xf32>
      tpu.vector_store %arg4[%c0_27, %c0_28], %26 {strides = array<i32>} : memref<8x128xf32, #tpu.memory_space<vmem>>, vector<8x128xf32>,
      %c0_29 = arith.constant 0 : index
      %c0_30 = arith.constant 0 : index
      %28 = vector.load %arg7[%c0_29, %c0_30] : memref<8x128xf32, #tpu.memory_space<vmem>>, vector<8x128xf32>
      %c0_31 = arith.constant 0 : index
      %c0_32 = arith.constant 0 : index
      %29 = vector.load %arg5[%c0_31, %c0_32] : memref<8x128xf32, #tpu.memory_space<vmem>>, vector<8x128xf32>
      tpu.vector_store %arg5[%c0_31, %c0_32], %28 {strides = array<i32>} : memref<8x128xf32, #tpu.memory_space<vmem>>, vector<8x128xf32>,
    } else {
    }
    return
  }
  func.func @transform_0(%arg0: i32, %arg1: i32) -> (i32, i32) {
    %c0_i32 = arith.constant 0 : i32
    return %arg0, %arg1 : i32, i32
  }
  func.func @transform_1(%arg0: i32, %arg1: i32) -> (i32, i32) {
    %c0_i32 = arith.constant 0 : i32
    return %arg0, %arg1 : i32, i32
  }
  func.func @transform_2(%arg0: i32, %arg1: i32) -> (i32, i32) {
    %c0_i32 = arith.constant 0 : i32
    %c0_i32_0 = arith.constant 0 : i32
    return %arg0, %c0_i32 : i32, i32
  }
  func.func @transform_3(%arg0: i32, %arg1: i32) -> (i32, i32) {
    %c0_i32 = arith.constant 0 : i32
    %c0_i32_0 = arith.constant 0 : i32
    return %arg0, %c0_i32 : i32, i32
  }
}

</mosaic_0001>

<llo_original>
// kernel: tpu_custom_call.1
$region0: #{tpu_custom_call.1}
  #allocation0 [shape = 'u32[]', space=smem, size = 0x4, offset = 0x4, fixed_abs, tag = 'smem constant byte address 0x4 - core index']
  #allocation1 [shape = 'u32[144,128]{1,0:T(1,128)}', space=vmem, size = 0x12000, scoped, tag = 'internal scratch']
  #allocation2 [shape = 'f32[8,128]{1,0:T(8,128)}', space=vmem, size = 0x1000, scoped, tag = 'scratch operand']
  #allocation3 [shape = 'f32[8,128]{1,0:T(8,128)}', space=vmem, size = 0x1000, scoped, tag = 'scratch operand']
  %s0 = inlined_call_operand.hbm [shape: f32[8,256], index: 0, kind: input, shape index: {}]
  %s1 = inlined_call_operand.hbm [shape: f32[8,256], index: 1, kind: input, shape index: {}]
  %s2 = inlined_call_operand.hbm [shape: f32[8,128], index: 2, kind: output, shape index: {0}]
  %s3 = inlined_call_operand.hbm [shape: f32[8,128], index: 3, kind: output, shape index: {1}]
  %4 = xla_tuple %s2, %s3
  %s5 = sld [smem:[#allocation0]]
  $region42: #{tpu_custom_call.1} parent=0
    _
  %s7 = ssub.s32 1, %s5
  %s8 = scalar_select 0, %s7, %s5
  $region1: #{tpu_custom_call.1} parent=0
    #allocation4 [shape = 'u8[8192]{0}', space=vmem, size = 0x2000, scoped, tag = 'input window, operand 0, single buffered']
    #allocation5 [shape = 's32[1]{0}', space=sflag, size = 0x4, scoped, tag = 'scoped memory for tpu_custom_call.1']
    #allocation6 [shape = 's32[1]{0}', space=sflag, size = 0x4, scoped, tag = 'scoped memory for tpu_custom_call.1']
    #allocation7 [shape = 'u8[8192]{0}', space=vmem, size = 0x2000, scoped, tag = 'input window, operand 1, single buffered']
    #allocation8 [shape = 's32[1]{0}', space=sflag, size = 0x4, scoped, tag = 'scoped memory for tpu_custom_call.1']
    #allocation9 [shape = 'u8[4096]{0}', space=vmem, size = 0x1000, scoped, tag = 'output window, operand 0, single buffered']
    #allocation10 [shape = 'u8[4096]{0}', space=vmem, size = 0x1000, scoped, tag = 'output window, operand 1, single buffered']
    #allocation11 [shape = 's32[1]{0}', space=sflag, size = 0x4, scoped, tag = 'scoped memory for tpu_custom_call.1']
    %9 = vsyncpa [#allocation5], 0
    %10 = vsyncpa [#allocation8], 0
    %11 = vsyncpa [#allocation6], 0
    %12 = vsyncpa [#allocation11], 0
    // Predicated region
    $region2: #{tpu_custom_call.1} parent=1 // pred_check
      _
    $region3: #{tpu_custom_call.1} parent=1 // pred_check_branch
      %14 = sbr.rel (0) target = $region5
    $region4: #{tpu_custom_call.1} parent=1 // pred_region
      %s16 = ssub.s32 256, 256
      %17 = vsyncadd [#allocation5], %s16
      %s19 = sshll.u32 [#allocation4], 4
      %s20 = int_to_ptr.vmem [resolvable:$true] %s19
      %22 = dma.hbm_to_vmem [thread:$0]  %s0, 256, %s20, [#allocation5]
    $region5: #{tpu_custom_call.1} parent=1 // pred_fallthru
      _
    // Predicated region
    $region6: #{tpu_custom_call.1} parent=1 // pred_check
      _
    $region7: #{tpu_custom_call.1} parent=1 // pred_check_branch
      %24 = sbr.rel (0) target = $region9
    $region8: #{tpu_custom_call.1} parent=1 // pred_region
      %s26 = ssub.s32 256, 256
      %27 = vsyncadd [#allocation8], %s26
      %s29 = sshll.u32 [#allocation7], 4
      %s30 = int_to_ptr.vmem [resolvable:$true] %s29
      %32 = dma.hbm_to_vmem [thread:$0]  %s1, 256, %s30, [#allocation8]
    $region9: #{tpu_custom_call.1} parent=1 // pred_fallthru
      _
    // Predicated region
    $region10: #{tpu_custom_call.1} parent=1 // pred_check
      _
    $region11: #{tpu_custom_call.1} parent=1 // pred_check_branch
      %34 = sbr.rel (0) target = $region13
    $region12: #{tpu_custom_call.1} parent=1 // pred_region
      %35 = dma.done [#allocation5], 256
    $region13: #{tpu_custom_call.1} parent=1 // pred_fallthru
      _
    // Predicated region
    $region14: #{tpu_custom_call.1} parent=1 // pred_check
      _
    $region15: #{tpu_custom_call.1} parent=1 // pred_check_branch
      %37 = sbr.rel (0) target = $region17
    $region16: #{tpu_custom_call.1} parent=1 // pred_region
      %38 = dma.done [#allocation8], 256
    $region17: #{tpu_custom_call.1} parent=1 // pred_fallthru
      _
    %p39 = scmp.eq.s32.totalorder 0, 0
    // Predicated region
    $region18: #{tpu_custom_call.1} parent=1 // pred_check
      %p40 = pneg %p39
    $region19: #{tpu_custom_call.1} parent=1 // pred_check_branch
      %42 = sbr.rel (%p40) target = $region21
    $region20: #{tpu_custom_call.1} parent=1 // pred_region
      %43 = vst [vmem:[#allocation2] sm:$0xff] 0.0
      %44 = vst [vmem:[#allocation3] sm:$0xff] 0.0
    $region21: #{tpu_custom_call.1} parent=1 // pred_fallthru
      _
    %v45 = vld [vmem:[#allocation4] sm:$0xff]
    %v46 = vld [vmem:[#allocation7] sm:$0xff]
    %v47 = vld [vmem:[#allocation2] sm:$0xff]
    %v48 = vmul.f32 %v45, %v46
    %v49 = vadd.f32 %v47, %v48
    %50 = vst [vmem:[#allocation2] sm:$0xff] %v49
    %v51 = vld [vmem:[#allocation3] sm:$0xff]
    %v52 = vadd.f32 %v45, %v46
    %v53 = vadd.f32 %v51, %v52
    %54 = vst [vmem:[#allocation3] sm:$0xff] %v53
    %v55 = vld [vmem:[#allocation4 + $0x8] sm:$0xff]
    %v56 = vld [vmem:[#allocation7 + $0x8] sm:$0xff]
    %v57 = vld [vmem:[#allocation2] sm:$0xff]
    %v58 = vmul.f32 %v55, %v56
    %v59 = vadd.f32 %v57, %v58
    %60 = vst [vmem:[#allocation2] sm:$0xff] %v59
    %v61 = vld [vmem:[#allocation3] sm:$0xff]
    %v62 = vadd.f32 %v55, %v56
    %v63 = vadd.f32 %v61, %v62
    %64 = vst [vmem:[#allocation3] sm:$0xff] %v63
    // Predicated region
    $region22: #{tpu_custom_call.1} parent=1 // pred_check
      %p65 = pneg %p39
    $region23: #{tpu_custom_call.1} parent=1 // pred_check_branch
      %67 = sbr.rel (%p65) target = $region25
    $region24: #{tpu_custom_call.1} parent=1 // pred_region
      %v68 = vld [vmem:[#allocation2] sm:$0xff]
      %69 = vst [vmem:[#allocation9] sm:$0xff] %v68
      %v70 = vld [vmem:[#allocation3] sm:$0xff]
      %71 = vst [vmem:[#allocation10] sm:$0xff] %v70
    $region25: #{tpu_custom_call.1} parent=1 // pred_fallthru
      _
    // Predicated region
    $region26: #{tpu_custom_call.1} parent=1 // pred_check
      _
    $region27: #{tpu_custom_call.1} parent=1 // pred_check_branch
      %73 = sbr.rel (0) target = $region29
    $region28: #{tpu_custom_call.1} parent=1 // pred_region
      %s75 = ssub.s32 128, 128
      %76 = vsyncadd [#allocation6], %s75
      %s78 = sshll.u32 [#allocation9], 4
      %s79 = int_to_ptr.vmem [resolvable:$true] %s78
      %81 = dma.vmem_to_hbm [thread:$0]  %s79, 128, %s2, [#allocation6]
    $region29: #{tpu_custom_call.1} parent=1 // pred_fallthru
      _
    // Predicated region
    $region30: #{tpu_custom_call.1} parent=1 // pred_check
      _
    $region31: #{tpu_custom_call.1} parent=1 // pred_check_branch
      %83 = sbr.rel (0) target = $region33
    $region32: #{tpu_custom_call.1} parent=1 // pred_region
      %s85 = ssub.s32 128, 128
      %86 = vsyncadd [#allocation11], %s85
      %s88 = sshll.u32 [#allocation10], 4
      %s89 = int_to_ptr.vmem [resolvable:$true] %s88
      %91 = dma.vmem_to_hbm [thread:$0]  %s89, 128, %s3, [#allocation11]
    $region33: #{tpu_custom_call.1} parent=1 // pred_fallthru
      _
    // Predicated region
    $region34: #{tpu_custom_call.1} parent=1 // pred_check
      _
    $region35: #{tpu_custom_call.1} parent=1 // pred_check_branch
      %93 = sbr.rel (0) target = $region37
    $region36: #{tpu_custom_call.1} parent=1 // pred_region
      %94 = dma.done [#allocation6], 128
    $region37: #{tpu_custom_call.1} parent=1 // pred_fallthru
      _
    // Predicated region
    $region38: #{tpu_custom_call.1} parent=1 // pred_check
      _
    $region39: #{tpu_custom_call.1} parent=1 // pred_check_branch
      %96 = sbr.rel (0) target = $region41
    $region40: #{tpu_custom_call.1} parent=1 // pred_region
      %97 = dma.done [#allocation11], 128
    $region41: #{tpu_custom_call.1} parent=1 // pred_fallthru
      _
    %98 = vsyncpa [#allocation5], 1
    %99 = vsyncpa [#allocation8], 1
    %100 = vsyncpa [#allocation6], 1
    %101 = vsyncpa [#allocation11], 1

</llo_original>
